<compile_context>
chip_gen: v6e
topology: v6e:2x2x1
jax: 0.10.0
libtpu: 0.0.40
codegen_flags: <defaults>
</compile_context>

<pallas_src>
import functools
import math

import jax
import jax.numpy as jnp
from jax.experimental import pallas as pl
from jax.experimental.pallas import tpu as pltpu

DIM = 32                 # model dim
SEQ = 8                  # sequence length
BATCH = 2
QK = 128                 # query_key_dim (module default)
HID = int(2.0 * DIM)     # hidden_dim = expansion_factor * dim
ROT = min(32, QK)        # rotary dim
EPS = 1e-5               # LayerNorm eps (PyTorch default)
NEG_BIG = -1e9           # kills cross-batch attention through relu^2

assert ROT % 2 == 0 and ROT <= QK  # rotary tables pad cos=1 / sin=0 past ROT


# ----------------------------- Pallas kernel --------------------------------

def gau_kernel(x_ref, wcat_ref, bcat_ref, dp_ref, rope_ref, bias_ref, wo_ref,
               o_ref, *, seq_len):
    """One grid step = `group` batch elements folded onto the sublane axis."""
    x = x_ref[...]                                   # (R, D), R = group*seq_len
    R, D = x.shape

    dp = dp_ref[...]                                 # (3, D): [ln_w; ln_b; bo]
    ln_w, ln_b, bo = dp[0:1], dp[1:2], dp[2:3]

    # ---- LayerNorm (biased variance), affine ----
    mean = jnp.mean(x, axis=-1, keepdims=True)
    xc = x - mean
    var = jnp.mean(xc * xc, axis=-1, keepdims=True)
    normed = xc * jax.lax.rsqrt(var + EPS) * ln_w + ln_b

    # ---- token shift of the first half of the features (+1 along seq) ----
    rolled = pltpu.roll(normed, shift=1, axis=0)     # row i <- row i-1 (wraps)
    row = jax.lax.broadcasted_iota(jnp.int32, (R, D), 0)
    col = jax.lax.broadcasted_iota(jnp.int32, (R, D), 1)
    shifted = jnp.where(row % seq_len == 0, 0.0, rolled)  # zero 1st row of each seq
    normed_x = jnp.where(col < D // 2, shifted, normed)

    # ---- fused [to_qk | to_hidden] projection + SiLU ----
    h = jnp.dot(normed_x, wcat_ref[...], preferred_element_type=jnp.float32)
    h = h + bcat_ref[...]
    h = h * jax.nn.sigmoid(h)
    qk = h[:, :QK]              # lanes [0,128): aligned, feeds the rolls first
    v = h[:, QK:QK + HID]
    gate = h[:, QK + HID:]

    # ---- rotary x OffsetScale x (1/N), all folded into precomputed tables:
    #      rot(qk*gamma+beta) == qk*A + rotate_half(qk)*C + B.
    #      rotate_half is computed ONCE on the shared qk activation. ----
    lane = jax.lax.broadcasted_iota(jnp.int32, qk.shape, 1)
    rh_qk = jnp.where(lane % 2 == 0,
                      -pltpu.roll(qk, shift=QK - 1, axis=1),   # -qk[j+1]
                      pltpu.roll(qk, shift=1, axis=1))         #  qk[j-1]
    rope = rope_ref[...]                              # (6R, QK)
    a_q, c_q, b_q = rope[0:R], rope[R:2 * R], rope[2 * R:3 * R]
    a_k, c_k, b_k = rope[3 * R:4 * R], rope[4 * R:5 * R], rope[5 * R:6 * R]
    q = qk * a_q + rh_qk * c_q + b_q                  # q already scaled by 1/N
    k = qk * a_k + rh_qk * c_k + b_k

    # ---- relu^2 attention; bias already holds (T5 bias)/N and the
    #      block-diagonal batch mask, so no extra scale / mask ops here ----
    sim = jax.lax.dot_general(q, k, (((1,), (1,)), ((), ())),
                              preferred_element_type=jnp.float32)   # (R, R)
    attn = jnp.maximum(sim + bias_ref[...], 0.0)
    attn = attn * attn
    # NOTE: dropout p=0.0 is identity; mask=None and causal=False in this config.

    out = jnp.dot(attn, v, preferred_element_type=jnp.float32)      # (R, HID)
    out = out * gate
    out = jnp.dot(out, wo_ref[...], preferred_element_type=jnp.float32) + bo
    o_ref[...] = (out + x).astype(o_ref.dtype)
    # TODO(synk): for realistic N (>=512) add a KV grid axis with flash-style
    # tiling instead of materializing the (R,R) attention, and cast matmul
    # operands to bf16 (f32 accumulation) -- irrelevant at N=8, D=32.


# --------------------------- wrapper / glue ----------------------------------

def _batch_group(batch):
    """How many batch elements to fold into one grid step.

    v7x has 2 TensorCores/chip -> keep batch as a parallel grid axis there.
    v5e/v6e are single-TC, so a size-B grid is just a serial loop with
    ~0.35us/step fixed overhead -> fold the whole batch into one step."""
    try:
        kind = jax.devices()[0].device_kind.lower()
    except Exception:
        kind = ""
    return 1 if "v7" in kind else batch


def rotary_tables(n, qk_dim, rot_dim, theta=10000.0):
    inv_freq = 1.0 / (theta ** (jnp.arange(0, rot_dim, 2, dtype=jnp.float32) / rot_dim))
    t = jnp.arange(n, dtype=jnp.float32)
    freqs = t[:, None] * inv_freq[None, :]                 # (n, rot//2)
    freqs = jnp.repeat(freqs, 2, axis=-1)                  # f0,f0,f1,f1,...
    cos = jnp.concatenate(
        [jnp.cos(freqs), jnp.ones((n, qk_dim - rot_dim), jnp.float32)], axis=-1)
    sin = jnp.concatenate(
        [jnp.sin(freqs), jnp.zeros((n, qk_dim - rot_dim), jnp.float32)], axis=-1)
    return cos, sin


def t5_rel_pos_bias(n, emb_weight, num_buckets=32, max_distance=128, scale=QK ** 0.5):
    # non-causal branch of T5RelativePositionBias._relative_position_bucket
    q_pos = jnp.arange(n)
    k_pos = jnp.arange(n)
    rel_pos = k_pos[None, :] - q_pos[:, None]
    neg = -rel_pos
    nb = num_buckets // 2
    ret = (neg < 0).astype(jnp.int32) * nb
    nabs = jnp.abs(neg)
    max_exact = nb // 2
    is_small = nabs < max_exact
    nsafe = jnp.maximum(nabs, 1).astype(jnp.float32)
    val_if_large = max_exact + (
        jnp.log(nsafe / max_exact) / math.log(max_distance / max_exact) * (nb - max_exact)
    ).astype(jnp.int32)
    val_if_large = jnp.minimum(val_if_large, nb - 1)
    bucket = ret + jnp.where(is_small, nabs, val_if_large)
    return emb_weight[bucket, 0] * scale                   # (n, n)


def _pair_swap(vec):                  # P: swap even/odd lanes (no sign)
    v2 = vec.reshape(-1, 2)
    return jnp.stack([v2[:, 1], v2[:, 0]], axis=-1).reshape(-1)


def _rotate_half_vec(vec):            # rh = sign * P
    v2 = vec.reshape(-1, 2)
    return jnp.stack([-v2[:, 1], v2[:, 0]], axis=-1).reshape(-1)


def _rope_tables(cos, sin, gamma, beta, scale):
    """rot(qk*gamma + beta) * scale == qk*A + rotate_half(qk)*C + B."""
    a = cos * gamma[None, :] * scale
    c = sin * _pair_swap(gamma)[None, :] * scale
    b = (cos * beta[None, :] + sin * _rotate_half_vec(beta)[None, :]) * scale
    return a, c, b


def gau_pallas(x, p, rel_emb, group=None):
    B, N, D = x.shape
    if group is None:
        group = _batch_group(B)
    assert B % group == 0
    R = group * N
    H2 = p["Wh"].shape[1]          # 2*HID
    qkd = p["Wqk"].shape[1]        # QK
    C = qkd + H2                   # fused projection width (128 + 128 = 256)

    # ---- pack parameters (fewer DMAs, no per-tile padding waste) ----
    w_cat = jnp.concatenate([p["Wqk"], p["Wh"]], axis=1)                 # (D, C)
    b_cat = jnp.concatenate([p["bqk"], p["bh"]], axis=1)                 # (1, C)
    dparams = jnp.concatenate([p["ln_w"], p["ln_b"], p["bo"]], axis=0)   # (3, D)

    # ---- position tables: rotary x OffsetScale x (1/N on the q side) ----
    cos, sin = rotary_tables(N, qkd, ROT)
    cos = jnp.tile(cos, (group, 1))
    sin = jnp.tile(sin, (group, 1))
    a_q, c_q, b_q = _rope_tables(cos, sin, p["gamma"][0], p["beta"][0], 1.0 / N)
    a_k, c_k, b_k = _rope_tables(cos, sin, p["gamma"][1], p["beta"][1], 1.0)
    rope = jnp.concatenate([a_q, c_q, b_q, a_k, c_k, b_k], axis=0)       # (6R, qkd)

    # ---- T5 relative-position bias, pre-scaled by 1/N.  When several batch
    #      elements share a grid step, off-diagonal blocks get -1e9 so that
    #      relu(.)^2 zeroes any cross-batch attention exactly. ----
    bias = t5_rel_pos_bias(N, rel_emb) / N                               # (N, N)
    if group > 1:
        blk = jnp.arange(R) // N
        bias = jnp.where(blk[:, None] == blk[None, :],
                         jnp.tile(bias, (group, group)), NEG_BIG)        # (R, R)

    x2 = x.reshape(B * N, D)
    rep = lambda g: (0, 0)
    kernel = functools.partial(gau_kernel, seq_len=N)
    out = pl.pallas_call(
        kernel,
        out_shape=jax.ShapeDtypeStruct((B * N, D), x.dtype),
        grid=(B // group,),
        in_specs=[
            pl.BlockSpec((R, D), lambda g: (g, 0)),       # x (folded batch rows)
            pl.BlockSpec((D, C), rep),                    # [Wqk | Wh]
            pl.BlockSpec((1, C), rep),                    # [bqk | bh]
            pl.BlockSpec((3, D), rep),                    # [ln_w; ln_b; bo]
            pl.BlockSpec((6 * R, qkd), rep),              # rotary/offset tables
            pl.BlockSpec((R, R), rep),                    # (T5 bias)/N + block mask
            pl.BlockSpec(p["Wo"].shape, rep),             # to_out W
        ],
        out_specs=pl.BlockSpec((R, D), lambda g: (g, 0)),
        compiler_params=pltpu.CompilerParams(dimension_semantics=("parallel",)),
    )(x2, w_cat, b_cat, dparams, rope, bias, p["Wo"])
    return out.reshape(B, N, D)


# ---------------- pure-JAX reference (mirrors the PyTorch forward) -----------

def gau_reference(x, p, cos, sin, bias):
    mean = jnp.mean(x, -1, keepdims=True)
    var = jnp.mean((x - mean) ** 2, -1, keepdims=True)
    normed = (x - mean) / jnp.sqrt(var + EPS) * p["ln_w"][0] + p["ln_b"][0]
    D = x.shape[-1]
    x_shift, x_pass = normed[..., : D // 2], normed[..., D // 2:]
    x_shift = jnp.pad(x_shift, ((0, 0), (1, 0), (0, 0)))[:, :-1, :]
    normed = jnp.concatenate([x_shift, x_pass], axis=-1)
    h = normed @ p["Wh"] + p["bh"][0]
    h = h * jax.nn.sigmoid(h)
    v, gate = h[..., :HID], h[..., HID:]
    qk = normed @ p["Wqk"] + p["bqk"][0]
    qk = qk * jax.nn.sigmoid(qk)
    q = qk * p["gamma"][0] + p["beta"][0]
    k = qk * p["gamma"][1] + p["beta"][1]

    def rot(t):
        t2 = t.reshape(t.shape[:-1] + (t.shape[-1] // 2, 2))
        rh = jnp.stack([-t2[..., 1], t2[..., 0]], axis=-1).reshape(t.shape)
        return t * cos + rh * sin

    q, k = rot(q), rot(k)
    sim = jnp.einsum("bid,bjd->bij", q, k) + bias
    attn = jnp.maximum(sim / x.shape[1], 0.0) ** 2
    out = jnp.einsum("bij,bjd->bid", attn, v) * gate
    out = out @ p["Wo"] + p["bo"][0]
    return out + x


if __name__ == "__main__":
    key = jax.random.PRNGKey(0)
    ks = jax.random.split(key, 10)
    x = jax.random.normal(ks[0], (BATCH, SEQ, DIM), dtype=jnp.float32)

    params = {
        "ln_w": jnp.ones((1, DIM), jnp.float32),
        "ln_b": jnp.zeros((1, DIM), jnp.float32),
        "Wh": 0.05 * jax.random.normal(ks[1], (DIM, 2 * HID), dtype=jnp.float32),
        "bh": 0.05 * jax.random.normal(ks[2], (1, 2 * HID), dtype=jnp.float32),
        "Wqk": 0.05 * jax.random.normal(ks[3], (DIM, QK), dtype=jnp.float32),
        "bqk": 0.05 * jax.random.normal(ks[4], (1, QK), dtype=jnp.float32),
        "gamma": 0.02 * jax.random.normal(ks[5], (2, QK), dtype=jnp.float32),
        "beta": jnp.zeros((2, QK), jnp.float32),
        "Wo": 0.05 * jax.random.normal(ks[6], (HID, DIM), dtype=jnp.float32),
        "bo": 0.05 * jax.random.normal(ks[7], (1, DIM), dtype=jnp.float32),
    }
    rel_emb = jax.random.normal(ks[8], (32, 1), dtype=jnp.float32)  # Embedding(32,1)

    out = gau_pallas(x, params, rel_emb)
    out = jax.block_until_ready(out)

    cos, sin = rotary_tables(SEQ, QK, ROT)
    bias = t5_rel_pos_bias(SEQ, rel_emb)
    ref = gau_reference(x, params, cos, sin, bias)

    assert out.shape == (BATCH, SEQ, DIM)
    assert bool(jnp.allclose(out, ref, atol=2e-4, rtol=2e-4)), \
        f"max abs err = {float(jnp.max(jnp.abs(out - ref)))}"
    print("KERNEL_OK")
</pallas_src>

<mosaic_0001>
module attributes {stable_mosaic.version = 11 : i64} {
  func.func @gau_kernel(%arg0: i32, %arg1: memref<16x32xf32, #tpu.memory_space<vmem>>, %arg2: memref<32x256xf32, #tpu.memory_space<vmem>>, %arg3: memref<1x256xf32, #tpu.memory_space<vmem>>, %arg4: memref<3x32xf32, #tpu.memory_space<vmem>>, %arg5: memref<96x128xf32, #tpu.memory_space<vmem>>, %arg6: memref<16x16xf32, #tpu.memory_space<vmem>>, %arg7: memref<64x32xf32, #tpu.memory_space<vmem>>, %arg8: memref<16x32xf32, #tpu.memory_space<vmem>>) attributes {dimension_semantics = [#tpu.dimension_semantics<parallel>], iteration_bounds = array<i64: 1>, scalar_prefetch = 0 : i64, scratch_operands = 0 : i64, tpu.core_type = #tpu.core_type<tc>, window_params = [{transform_indices = @transform_0, window_bounds = array<i64: 16, 32>}, {pipeline_mode = #tpu.pipeline_mode<synchronous>, transform_indices = @transform_1, window_bounds = array<i64: 32, 256>}, {pipeline_mode = #tpu.pipeline_mode<synchronous>, transform_indices = @transform_2, window_bounds = array<i64: 1, 256>}, {pipeline_mode = #tpu.pipeline_mode<synchronous>, transform_indices = @transform_3, window_bounds = array<i64: 3, 32>}, {pipeline_mode = #tpu.pipeline_mode<synchronous>, transform_indices = @transform_4, window_bounds = array<i64: 96, 128>}, {pipeline_mode = #tpu.pipeline_mode<synchronous>, transform_indices = @transform_5, window_bounds = array<i64: 16, 16>}, {pipeline_mode = #tpu.pipeline_mode<synchronous>, transform_indices = @transform_6, window_bounds = array<i64: 64, 32>}, {transform_indices = @transform_7, window_bounds = array<i64: 16, 32>}]} {
    %c0 = arith.constant 0 : index
    %c0_0 = arith.constant 0 : index
    %0 = vector.load %arg1[%c0, %c0_0] : memref<16x32xf32, #tpu.memory_space<vmem>>, vector<16x32xf32>
    %c0_1 = arith.constant 0 : index
    %c0_2 = arith.constant 0 : index
    %1 = vector.load %arg4[%c0_1, %c0_2] : memref<3x32xf32, #tpu.memory_space<vmem>>, vector<3x32xf32>
    %2 = vector.extract_strided_slice %1 {offsets = [0, 0], sizes = [1, 32], strides = [1, 1]} : vector<3x32xf32> to vector<1x32xf32>
    %3 = vector.extract_strided_slice %1 {offsets = [1, 0], sizes = [1, 32], strides = [1, 1]} : vector<3x32xf32> to vector<1x32xf32>
    %4 = vector.extract_strided_slice %1 {offsets = [2, 0], sizes = [1, 32], strides = [1, 1]} : vector<3x32xf32> to vector<1x32xf32>
    %cst = arith.constant dense<0.000000e+00> : vector<16xf32>
    %5 = vector.multi_reduction <add>, %0, %cst [1] : vector<16x32xf32> to vector<16xf32>
    %6 = vector.shape_cast %5 : vector<16xf32> to vector<16x1xf32>
    %cst_3 = arith.constant 3.200000e+01 : f32
    %7 = vector.broadcast %cst_3 : f32 to vector<16x1xf32>
    %8 = arith.divf %6, %7 : vector<16x1xf32>
    %9 = vector.broadcast %8 : vector<16x1xf32> to vector<16x32xf32>
    %10 = arith.subf %0, %9 : vector<16x32xf32>
    %11 = arith.mulf %10, %10 : vector<16x32xf32>
    %cst_4 = arith.constant dense<0.000000e+00> : vector<16xf32>
    %12 = vector.multi_reduction <add>, %11, %cst_4 [1] : vector<16x32xf32> to vector<16xf32>
    %13 = vector.shape_cast %12 : vector<16xf32> to vector<16x1xf32>
    %cst_5 = arith.constant 3.200000e+01 : f32
    %14 = vector.broadcast %cst_5 : f32 to vector<16x1xf32>
    %15 = arith.divf %13, %14 : vector<16x1xf32>
    %cst_6 = arith.constant 9.99999974E-6 : f32
    %16 = vector.broadcast %cst_6 : f32 to vector<16x1xf32>
    %17 = arith.addf %15, %16 : vector<16x1xf32>
    %18 = math.rsqrt %17 : vector<16x1xf32>
    %19 = vector.broadcast %18 : vector<16x1xf32> to vector<16x32xf32>
    %20 = arith.mulf %10, %19 : vector<16x32xf32>
    %21 = vector.broadcast %2 : vector<1x32xf32> to vector<16x32xf32>
    %22 = arith.mulf %20, %21 : vector<16x32xf32>
    %23 = vector.broadcast %3 : vector<1x32xf32> to vector<16x32xf32>
    %24 = arith.addf %22, %23 : vector<16x32xf32>
    %c1_i32 = arith.constant 1 : i32
    %25 = tpu.dynamic_rotate %24 by %c1_i32 dim 0 : vector<16x32xf32>, i32 -> vector<16x32xf32>
    %26 = tpu.iota {dimensions = array<i32: 0>} : vector<16x32xi32>
    %27 = tpu.iota {dimensions = array<i32: 1>} : vector<16x32xi32>
    %c8_i32 = arith.constant 8 : i32
    %c0_i32 = arith.constant 0 : i32
    %28 = arith.cmpi eq, %c8_i32, %c0_i32 : i32
    %c1_i32_7 = arith.constant 1 : i32
    %29 = arith.select %28, %c1_i32_7, %c8_i32 : i32
    %30 = vector.broadcast %29 : i32 to vector<16x32xi32>
    %31 = arith.remsi %26, %30 : vector<16x32xi32>
    %c0_i32_8 = arith.constant 0 : i32
    %32 = vector.broadcast %c0_i32_8 : i32 to vector<16x32xi32>
    %33 = arith.cmpi ne, %31, %32 : vector<16x32xi32>
    %c0_i32_9 = arith.constant 0 : i32
    %34 = vector.broadcast %c0_i32_9 : i32 to vector<16x32xi32>
    %35 = arith.cmpi slt, %31, %34 : vector<16x32xi32>
    %c0_i32_10 = arith.constant 0 : i32
    %36 = arith.cmpi slt, %29, %c0_i32_10 : i32
    %37 = vector.broadcast %36 : i1 to vector<16x32xi1>
    %38 = vector.broadcast %37 : vector<16x32xi1> to vector<16x32xi1>
    %39 = arith.xori %35, %38 : vector<16x32xi1>
    %40 = arith.andi %39, %33 : vector<16x32xi1>
    %41 = vector.broadcast %29 : i32 to vector<16x32xi32>
    %42 = arith.addi %31, %41 : vector<16x32xi32>
    %43 = arith.select %40, %42, %31 : vector<16x32xi1>, vector<16x32xi32>
    %c0_i32_11 = arith.constant 0 : i32
    %44 = vector.broadcast %c0_i32_11 : i32 to vector<16x32xi32>
    %45 = arith.cmpi eq, %43, %44 : vector<16x32xi32>
    %cst_12 = arith.constant 0.000000e+00 : f32
    %46 = vector.broadcast %cst_12 : f32 to vector<16x32xf32>
    %47 = arith.select %45, %46, %25 : vector<16x32xi1>, vector<16x32xf32>
    %c16_i32 = arith.constant 16 : i32
    %48 = vector.broadcast %c16_i32 : i32 to vector<16x32xi32>
    %49 = arith.cmpi slt, %27, %48 : vector<16x32xi32>
    %50 = arith.select %49, %47, %24 : vector<16x32xi1>, vector<16x32xf32>
    %c0_13 = arith.constant 0 : index
    %c0_14 = arith.constant 0 : index
    %51 = vector.load %arg2[%c0_13, %c0_14] : memref<32x256xf32, #tpu.memory_space<vmem>>, vector<32x256xf32>
    %cst_15 = arith.constant dense<0.000000e+00> : vector<16x256xf32>
    %52 = tpu.matmul %50, %51, %cst_15 {dimension_numbers = #tpu.dot_dimension_numbers<[1], [0], [0], [1], [0, 0, 1, 1], [], []>} : vector<16x32xf32>, vector<32x256xf32>, vector<16x256xf32> -> vector<16x256xf32>
    %c0_16 = arith.constant 0 : index
    %c0_17 = arith.constant 0 : index
    %53 = vector.load %arg3[%c0_16, %c0_17] : memref<1x256xf32, #tpu.memory_space<vmem>>, vector<1x256xf32>
    %54 = vector.broadcast %53 : vector<1x256xf32> to vector<16x256xf32>
    %55 = arith.addf %52, %54 : vector<16x256xf32>
    %56 = arith.negf %55 : vector<16x256xf32>
    %57 = math.exp %56 : vector<16x256xf32>
    %cst_18 = arith.constant 1.000000e+00 : f32
    %58 = vector.broadcast %cst_18 : f32 to vector<16x256xf32>
    %59 = arith.addf %58, %57 : vector<16x256xf32>
    %60 = arith.divf %58, %59 : vector<16x256xf32>
    %61 = arith.mulf %55, %60 : vector<16x256xf32>
    %62 = vector.extract_strided_slice %61 {offsets = [0, 0], sizes = [16, 128], strides = [1, 1]} : vector<16x256xf32> to vector<16x128xf32>
    %63 = vector.extract_strided_slice %61 {offsets = [0, 128], sizes = [16, 64], strides = [1, 1]} : vector<16x256xf32> to vector<16x64xf32>
    %64 = vector.extract_strided_slice %61 {offsets = [0, 192], sizes = [16, 64], strides = [1, 1]} : vector<16x256xf32> to vector<16x64xf32>
    %65 = tpu.iota {dimensions = array<i32: 1>} : vector<16x128xi32>
    %c2_i32 = arith.constant 2 : i32
    %c0_i32_19 = arith.constant 0 : i32
    %66 = arith.cmpi eq, %c2_i32, %c0_i32_19 : i32
    %c1_i32_20 = arith.constant 1 : i32
    %67 = arith.select %66, %c1_i32_20, %c2_i32 : i32
    %68 = vector.broadcast %67 : i32 to vector<16x128xi32>
    %69 = arith.remsi %65, %68 : vector<16x128xi32>
    %c0_i32_21 = arith.constant 0 : i32
    %70 = vector.broadcast %c0_i32_21 : i32 to vector<16x128xi32>
    %71 = arith.cmpi ne, %69, %70 : vector<16x128xi32>
    %c0_i32_22 = arith.constant 0 : i32
    %72 = vector.broadcast %c0_i32_22 : i32 to vector<16x128xi32>
    %73 = arith.cmpi slt, %69, %72 : vector<16x128xi32>
    %c0_i32_23 = arith.constant 0 : i32
    %74 = arith.cmpi slt, %67, %c0_i32_23 : i32
    %75 = vector.broadcast %74 : i1 to vector<16x128xi1>
    %76 = vector.broadcast %75 : vector<16x128xi1> to vector<16x128xi1>
    %77 = arith.xori %73, %76 : vector<16x128xi1>
    %78 = arith.andi %77, %71 : vector<16x128xi1>
    %79 = vector.broadcast %67 : i32 to vector<16x128xi32>
    %80 = arith.addi %69, %79 : vector<16x128xi32>
    %81 = arith.select %78, %80, %69 : vector<16x128xi1>, vector<16x128xi32>
    %c0_i32_24 = arith.constant 0 : i32
    %82 = vector.broadcast %c0_i32_24 : i32 to vector<16x128xi32>
    %83 = arith.cmpi eq, %81, %82 : vector<16x128xi32>
    %c127_i32 = arith.constant 127 : i32
    %84 = tpu.dynamic_rotate %62 by %c127_i32 dim 1 : vector<16x128xf32>, i32 -> vector<16x128xf32>
    %cst_25 = arith.constant 0.000000e+00 : f32
    %85 = vector.broadcast %cst_25 : f32 to vector<16x128xf32>
    %86 = arith.subf %85, %84 : vector<16x128xf32>
    %c1_i32_26 = arith.constant 1 : i32
    %87 = tpu.dynamic_rotate %62 by %c1_i32_26 dim 1 : vector<16x128xf32>, i32 -> vector<16x128xf32>
    %88 = arith.select %83, %86, %87 : vector<16x128xi1>, vector<16x128xf32>
    %c0_27 = arith.constant 0 : index
    %c0_28 = arith.constant 0 : index
    %89 = vector.load %arg5[%c0_27, %c0_28] : memref<96x128xf32, #tpu.memory_space<vmem>>, vector<96x128xf32>
    %90 = vector.extract_strided_slice %89 {offsets = [0, 0], sizes = [16, 128], strides = [1, 1]} : vector<96x128xf32> to vector<16x128xf32>
    %91 = vector.extract_strided_slice %89 {offsets = [16, 0], sizes = [16, 128], strides = [1, 1]} : vector<96x128xf32> to vector<16x128xf32>
    %92 = vector.extract_strided_slice %89 {offsets = [32, 0], sizes = [16, 128], strides = [1, 1]} : vector<96x128xf32> to vector<16x128xf32>
    %93 = vector.extract_strided_slice %89 {offsets = [48, 0], sizes = [16, 128], strides = [1, 1]} : vector<96x128xf32> to vector<16x128xf32>
    %94 = vector.extract_strided_slice %89 {offsets = [64, 0], sizes = [16, 128], strides = [1, 1]} : vector<96x128xf32> to vector<16x128xf32>
    %95 = vector.extract_strided_slice %89 {offsets = [80, 0], sizes = [16, 128], strides = [1, 1]} : vector<96x128xf32> to vector<16x128xf32>
    %96 = arith.mulf %62, %90 : vector<16x128xf32>
    %97 = arith.mulf %88, %91 : vector<16x128xf32>
    %98 = arith.addf %96, %97 : vector<16x128xf32>
    %99 = arith.addf %98, %92 : vector<16x128xf32>
    %100 = arith.mulf %62, %93 : vector<16x128xf32>
    %101 = arith.mulf %88, %94 : vector<16x128xf32>
    %102 = arith.addf %100, %101 : vector<16x128xf32>
    %103 = arith.addf %102, %95 : vector<16x128xf32>
    %cst_29 = arith.constant dense<0.000000e+00> : vector<16x16xf32>
    %104 = tpu.matmul %99, %103, %cst_29 {dimension_numbers = #tpu.dot_dimension_numbers<[1], [1], [0], [0], [0, 0, 1, 0], [], []>} : vector<16x128xf32>, vector<16x128xf32>, vector<16x16xf32> -> vector<16x16xf32>
    %c0_30 = arith.constant 0 : index
    %c0_31 = arith.constant 0 : index
    %105 = vector.load %arg6[%c0_30, %c0_31] : memref<16x16xf32, #tpu.memory_space<vmem>>, vector<16x16xf32>
    %106 = arith.addf %104, %105 : vector<16x16xf32>
    %cst_32 = arith.constant 0.000000e+00 : f32
    %107 = vector.broadcast %cst_32 : f32 to vector<16x16xf32>
    %108 = arith.maximumf %106, %107 : vector<16x16xf32>
    %109 = arith.mulf %108, %108 : vector<16x16xf32>
    %cst_33 = arith.constant dense<0.000000e+00> : vector<16x64xf32>
    %110 = tpu.matmul %109, %63, %cst_33 {dimension_numbers = #tpu.dot_dimension_numbers<[1], [0], [0], [1], [0, 0, 1, 1], [], []>} : vector<16x16xf32>, vector<16x64xf32>, vector<16x64xf32> -> vector<16x64xf32>
    %111 = arith.mulf %110, %64 : vector<16x64xf32>
    %c0_34 = arith.constant 0 : index
    %c0_35 = arith.constant 0 : index
    %112 = vector.load %arg7[%c0_34, %c0_35] : memref<64x32xf32, #tpu.memory_space<vmem>>, vector<64x32xf32>
    %cst_36 = arith.constant dense<0.000000e+00> : vector<16x32xf32>
    %113 = tpu.matmul %111, %112, %cst_36 {dimension_numbers = #tpu.dot_dimension_numbers<[1], [0], [0], [1], [0, 0, 1, 1], [], []>} : vector<16x64xf32>, vector<64x32xf32>, vector<16x32xf32> -> vector<16x32xf32>
    %114 = vector.broadcast %4 : vector<1x32xf32> to vector<16x32xf32>
    %115 = arith.addf %113, %114 : vector<16x32xf32>
    %116 = arith.addf %115, %0 : vector<16x32xf32>
    %c0_37 = arith.constant 0 : index
    %c0_38 = arith.constant 0 : index
    %117 = vector.load %arg8[%c0_37, %c0_38] : memref<16x32xf32, #tpu.memory_space<vmem>>, vector<16x32xf32>
    tpu.vector_store %arg8[%c0_37, %c0_38], %116 {strides = array<i32>} : memref<16x32xf32, #tpu.memory_space<vmem>>, vector<16x32xf32>,
    return
  }
  func.func @transform_0(%arg0: i32) -> (i32, i32) {
    %c0_i32 = arith.constant 0 : i32
    %c0_i32_0 = arith.constant 0 : i32
    return %arg0, %c0_i32 : i32, i32
  }
  func.func @transform_1(%arg0: i32) -> (i32, i32) {
    %c0_i32 = arith.constant 0 : i32
    %c0_i32_0 = arith.constant 0 : i32
    %c0_i32_1 = arith.constant 0 : i32
    return %c0_i32, %c0_i32_0 : i32, i32
  }
  func.func @transform_2(%arg0: i32) -> (i32, i32) {
    %c0_i32 = arith.constant 0 : i32
    %c0_i32_0 = arith.constant 0 : i32
    %c0_i32_1 = arith.constant 0 : i32
    return %c0_i32, %c0_i32_0 : i32, i32
  }
  func.func @transform_3(%arg0: i32) -> (i32, i32) {
    %c0_i32 = arith.constant 0 : i32
    %c0_i32_0 = arith.constant 0 : i32
    %c0_i32_1 = arith.constant 0 : i32
    return %c0_i32, %c0_i32_0 : i32, i32
  }
  func.func @transform_4(%arg0: i32) -> (i32, i32) {
    %c0_i32 = arith.constant 0 : i32
    %c0_i32_0 = arith.constant 0 : i32
    %c0_i32_1 = arith.constant 0 : i32
    return %c0_i32, %c0_i32_0 : i32, i32
  }
  func.func @transform_5(%arg0: i32) -> (i32, i32) {
    %c0_i32 = arith.constant 0 : i32
    %c0_i32_0 = arith.constant 0 : i32
    %c0_i32_1 = arith.constant 0 : i32
    return %c0_i32, %c0_i32_0 : i32, i32
  }
  func.func @transform_6(%arg0: i32) -> (i32, i32) {
    %c0_i32 = arith.constant 0 : i32
    %c0_i32_0 = arith.constant 0 : i32
    %c0_i32_1 = arith.constant 0 : i32
    return %c0_i32, %c0_i32_0 : i32, i32
  }
  func.func @transform_7(%arg0: i32) -> (i32, i32) {
    %c0_i32 = arith.constant 0 : i32
    %c0_i32_0 = arith.constant 0 : i32
    return %arg0, %c0_i32 : i32, i32
  }
}

</mosaic_0001>

<llo_original>
// kernel: tpu_custom_call.1
$region0: #{tpu_custom_call.1}
  #allocation0 [shape = 'u32[]', space=smem, size = 0x4, offset = 0x4, fixed_abs, tag = 'smem constant byte address 0x4 - core index']
  #allocation1 [shape = 'u32[144,128]{1,0:T(1,128)}', space=vmem, size = 0x12000, scoped, tag = 'internal scratch']
  %s0 = inlined_call_operand.hbm [shape: f32[16,32], index: 0, kind: input, shape index: {}]
  %s1 = inlined_call_operand.hbm [shape: f32[32,256], index: 1, kind: input, shape index: {}]
  %s2 = inlined_call_operand.vmem [shape: f32[1,256], index: 2, kind: input, shape index: {}]
  %s3 = inlined_call_operand.vmem [shape: f32[3,32], index: 3, kind: input, shape index: {}]
  %s4 = inlined_call_operand.vmem [shape: f32[96,128], index: 4, kind: input, shape index: {}]
  %s5 = inlined_call_operand.hbm [shape: f32[16,16], index: 5, kind: input, shape index: {}]
  %s6 = inlined_call_operand.vmem [shape: f32[64,32], index: 6, kind: input, shape index: {}]
  %s7 = inlined_call_operand.hbm [shape: f32[16,32], index: 7, kind: output, shape index: {}]
  %s8 = sld [smem:[#allocation0]]
  $region50: #{tpu_custom_call.1} parent=0
    _
  %s10 = ssub.s32 1, %s8
  %s11 = scalar_select 0, %s10, %s8
  $region1: #{tpu_custom_call.1} parent=0
    #allocation2 [shape = 'u8[8192]{0}', space=vmem, size = 0x2000, scoped, tag = 'input window, operand 0, single buffered']
    #allocation3 [shape = 's32[1]{0}', space=sflag, size = 0x4, scoped, tag = 'scoped memory for tpu_custom_call.1']
    #allocation4 [shape = 's32[1]{0}', space=sflag, size = 0x4, scoped, tag = 'scoped memory for tpu_custom_call.1']
    #allocation5 [shape = 'u8[32768]{0}', space=vmem, size = 0x8000, scoped, tag = 'input window, operand 1, single buffered']
    #allocation6 [shape = 's32[1]{0}', space=sflag, size = 0x4, scoped, tag = 'scoped memory for tpu_custom_call.1']
    #allocation7 [shape = 'u8[8192]{0}', space=vmem, size = 0x2000, scoped, tag = 'input window, operand 5, single buffered']
    #allocation8 [shape = 'u8[8192]{0}', space=vmem, size = 0x2000, scoped, tag = 'output window, operand 0, single buffered']
    %12 = vsyncpa [#allocation3], 0
    %13 = vsyncpa [#allocation6], 0
    %14 = vsyncpa [#allocation4], 0
    // Predicated region
    $region2: #{tpu_custom_call.1} parent=1 // pred_check
      _
    $region3: #{tpu_custom_call.1} parent=1 // pred_check_branch
      %16 = sbr.rel (0) target = $region5
    $region4: #{tpu_custom_call.1} parent=1 // pred_region
      %s18 = ssub.s32 256, 256
      %19 = vsyncadd [#allocation3], %s18
      %s20 = sshll.u32 [#allocation2], 4
      %s21 = int_to_ptr.vmem [resolvable:$true] %s20
      %26 = dma.hbm_to_vmem [thread:$0]  %s0, 256, %s21, [#allocation3], 128, 128, 8
    $region5: #{tpu_custom_call.1} parent=1 // pred_fallthru
      _
    // Predicated region
    $region6: #{tpu_custom_call.1} parent=1 // pred_check
      _
    $region7: #{tpu_custom_call.1} parent=1 // pred_check_branch
      %28 = sbr.rel (0) target = $region9
    $region8: #{tpu_custom_call.1} parent=1 // pred_region
      %s30 = ssub.s32 1024, 1024
      %31 = vsyncadd [#allocation6], %s30
      %s32 = sshll.u32 [#allocation5], 4
      %s33 = int_to_ptr.vmem [resolvable:$true] %s32
      %38 = dma.hbm_to_vmem [thread:$0]  %s1, 1024, %s33, [#allocation6], 256, 256, 16
    $region9: #{tpu_custom_call.1} parent=1 // pred_fallthru
      _
    // Predicated region
    $region10: #{tpu_custom_call.1} parent=1 // pred_check
      _
    $region11: #{tpu_custom_call.1} parent=1 // pred_check_branch
      %40 = sbr.rel (0) target = $region13
    $region12: #{tpu_custom_call.1} parent=1 // pred_region
      _
    $region13: #{tpu_custom_call.1} parent=1 // pred_fallthru
      _
    // Predicated region
    $region14: #{tpu_custom_call.1} parent=1 // pred_check
      _
    $region15: #{tpu_custom_call.1} parent=1 // pred_check_branch
      %42 = sbr.rel (0) target = $region17
    $region16: #{tpu_custom_call.1} parent=1 // pred_region
      _
    $region17: #{tpu_custom_call.1} parent=1 // pred_fallthru
      _
    // Predicated region
    $region18: #{tpu_custom_call.1} parent=1 // pred_check
      _
    $region19: #{tpu_custom_call.1} parent=1 // pred_check_branch
      %44 = sbr.rel (0) target = $region21
    $region20: #{tpu_custom_call.1} parent=1 // pred_region
      _
    $region21: #{tpu_custom_call.1} parent=1 // pred_fallthru
      _
    // Predicated region
    $region22: #{tpu_custom_call.1} parent=1 // pred_check
      _
    $region23: #{tpu_custom_call.1} parent=1 // pred_check_branch
      %46 = sbr.rel (0) target = $region25
    $region24: #{tpu_custom_call.1} parent=1 // pred_region
      %s48 = ssub.s32 256, 256
      %49 = vsyncadd [#allocation6], %s48
      %s50 = sshll.u32 [#allocation7], 4
      %s51 = int_to_ptr.vmem [resolvable:$true] %s50
      %56 = dma.hbm_to_vmem [thread:$0]  %s5, 256, %s51, [#allocation6], 128, 128, 8
    $region25: #{tpu_custom_call.1} parent=1 // pred_fallthru
      _
    // Predicated region
    $region26: #{tpu_custom_call.1} parent=1 // pred_check
      _
    $region27: #{tpu_custom_call.1} parent=1 // pred_check_branch
      %58 = sbr.rel (0) target = $region29
    $region28: #{tpu_custom_call.1} parent=1 // pred_region
      _
    $region29: #{tpu_custom_call.1} parent=1 // pred_fallthru
      _
    // Predicated region
    $region30: #{tpu_custom_call.1} parent=1 // pred_check
      _
    $region31: #{tpu_custom_call.1} parent=1 // pred_check_branch
      %60 = sbr.rel (0) target = $region33
    $region32: #{tpu_custom_call.1} parent=1 // pred_region
      %61 = dma.done [#allocation3], 256
    $region33: #{tpu_custom_call.1} parent=1 // pred_fallthru
      _
    // Predicated region
    $region34: #{tpu_custom_call.1} parent=1 // pred_check
      _
    $region35: #{tpu_custom_call.1} parent=1 // pred_check_branch
      %63 = sbr.rel (0) target = $region37
    $region36: #{tpu_custom_call.1} parent=1 // pred_region
      %64 = dma.done [#allocation6], 1024
    $region37: #{tpu_custom_call.1} parent=1 // pred_fallthru
      _
    // Predicated region
    $region38: #{tpu_custom_call.1} parent=1 // pred_check
      _
    $region39: #{tpu_custom_call.1} parent=1 // pred_check_branch
      %66 = sbr.rel (0) target = $region41
    $region40: #{tpu_custom_call.1} parent=1 // pred_region
      %67 = dma.done [#allocation6], 256
    $region41: #{tpu_custom_call.1} parent=1 // pred_fallthru
      _
    %v68 = vld [vmem:[#allocation2] sm:$0xff]
    %v69 = vld [vmem:[#allocation2 + $0x8] sm:$0xff]
    %v70 = vld [vmem:[%s3] sm:$0x7]
    %vm71 = vcmask 261120
    %v72 = vsel %vm71, %v68, 0.0
    %73 = vadd.xlane.f32.xlu0 %v72
    %v74 = vpop.xlane.xlu0 %73
    %v75 = vsel %vm71, %v69, 0.0
    %76 = vadd.xlane.f32.xlu0 %v75
    %v77 = vpop.xlane.xlu0 %76
    %v78 = vrcp.pop 32.0
    %v79 = vmul.f32 %v74, %v78
    %v80 = vmul.f32 %v77, %v78
    %v81 = vsub.f32 %v68, %v79
    %v82 = vsub.f32 %v69, %v80
    %v83 = vmul.f32 %v81, %v81
    %v84 = vmul.f32 %v82, %v82
    %v85 = vsel %vm71, %v83, 0.0
    %86 = vadd.xlane.f32.xlu0 %v85
    %v87 = vpop.xlane.xlu0 %86
    %v88 = vsel %vm71, %v84, 0.0
    %89 = vadd.xlane.f32.xlu0 %v88
    %v90 = vpop.xlane.xlu0 %89
    %v91 = vmul.f32 %v87, %v78
    %v92 = vmul.f32 %v90, %v78
    %v93 = vadd.f32 %v91, 1e-05
    %v94 = vadd.f32 %v92, 1e-05
    %v95 = vrsqrt.pop %v93
    %v96 = vrsqrt.pop %v94
    %v97 = vmul.f32 %v81, %v95
    %v98 = vmul.f32 %v82, %v96
    %v99 = vlaneseq
    %v100 = vshrl.u32 %v99, 7
    %v101 = vsub.s32 0, %v100
    %v102 = vrot.slane %v70, %v101
    %v103 = vmul.f32 %v97, %v102
    %v104 = vmul.f32 %v98, %v102
    %v105 = vlaneseq
    %v106 = vshrl.u32 %v105, 7
    %v107 = vsub.s32 1, %v106
    %v108 = vrot.slane %v70, %v107
    %v109 = vadd.f32 %v103, %v108
    %v110 = vadd.f32 %v104, %v108
    %v111 = vrot.slane %v109, 7
    %v112 = vrot.slane %v110, 7
    %v113 = vlaneseq
    %v114 = vshrl.u32 %v113, 7
    %vm115 = vcmp.lt.s32.totalorder %v114, 1
    %v116 = vsel %vm115, %v111, %v112
    %v117 = vsel %vm115, %v112, %v111
    %v118 = vadd.s32 %v114, 8
    %v119 = vlaneseq
    %v120 = vand.u32 %v119, 127
    %vm121 = vcmp.lt.s32.totalorder %v114, 0
    %v122 = vsub.s32 0, %v114
    %v123 = vsel %vm121, %v122, %v114
    %v124 = vshrl.u32 %v123, 3
    %v125 = vand.u32 %v123, 7
    %v126 = vsub.s32 0, %v125
    %v127 = vsel %vm121, %v126, %v125
    %vm128 = vcmp.lt.s32.totalorder %v118, 0
    %v129 = vsub.s32 0, %v118
    %v130 = vsel %vm128, %v129, %v118
    %v131 = vshrl.u32 %v130, 3
    %v132 = vand.u32 %v130, 7
    %v133 = vsub.s32 0, %v132
    %v134 = vsel %vm128, %v133, %v132
    %vm135 = vcmp.ne.s32.totalorder %v127, 0
    %vm136 = vcmp.ne.s32.totalorder %v134, 0
    %vm137 = vcmp.lt.s32.totalorder %v127, 0
    %vm138 = vcmp.lt.s32.totalorder %v134, 0
    %vm139 = vmand %vm137, %vm135
    %vm140 = vmand %vm138, %vm136
    %v141 = vadd.s32 %v127, 8
    %v142 = vadd.s32 %v134, 8
    %v143 = vsel %vm139, %v141, %v127
    %v144 = vsel %vm140, %v142, %v134
    %vm145 = vcmp.eq.s32.totalorder %v143, 0
    %vm146 = vcmp.eq.s32.totalorder %v144, 0
    %v147 = vsel %vm145, 0.0, %v117
    %v148 = vsel %vm146, 0.0, %v116
    %vm149 = vcmp.lt.s32.totalorder %v120, 16
    %v150 = vsel %vm149, %v147, %v109
    %v151 = vsel %vm149, %v148, %v110
    %v152 = vld [vmem:[#allocation5] sm:$0xff]
    %v153 = vld [vmem:[#allocation5 + $0x8] sm:$0xff]
    %v154 = vld [vmem:[#allocation5 + $0x10] sm:$0xff]
    %v155 = vld [vmem:[#allocation5 + $0x18] sm:$0xff]
    %v156 = vld [vmem:[#allocation5 + $0x20] sm:$0xff]
    %v157 = vld [vmem:[#allocation5 + $0x28] sm:$0xff]
    %v158 = vld [vmem:[#allocation5 + $0x30] sm:$0xff]
    %v159 = vld [vmem:[#allocation5 + $0x38] sm:$0xff]
    %v160 = vld [vmem:[%s2] sm:$0x3]
    %v162 = vlaneseq
    %v163 = vshrl.u32 %v162, 7
    %v164 = vsub.s32 0, %v163
    %v165 = vrot.slane %v160, %v164
    %v166 = vlaneseq
    %v167 = vshrl.u32 %v166, 7
    %v168 = vsub.s32 1, %v167
    %v169 = vrot.slane %v160, %v168
    %v173 = vsel %vm71, %v150, 0
    %v176 = vsel %vm71, %v151, 0
    %178 = vmatprep.subr.mxu0 0.0
    %179 = vmatpush1.msra.mxu0 0.0
    %180 = vmatprep.subr.mxu0 0.0
    %181 = vmatpush1.msra.mxu0 0.0
    %182 = vmatprep.subr.mxu0 0.0
    %183 = vmatpush1.msra.mxu0 0.0
    %184 = vmatprep.subr.mxu0 0.0
    %185 = vmatpush1.msra.mxu0 0.0
    %186 = vmatprep.subr.mxu0 0.0
    %187 = vmatpush1.msra.mxu0 0.0
    %188 = vmatprep.subr.mxu0 0.0
    %189 = vmatpush1.msra.mxu0 0.0
    %190 = vmatprep.subr.mxu0 0.0
    %191 = vmatpush1.msra.mxu0 0.0
    %192 = vmatprep.subr.mxu0 0.0
    %193 = vmatpush1.msra.mxu0 0.0
    %194 = vmatprep.subr.mxu0 0.0
    %195 = vmatpush1.msra.mxu0 0.0
    %196 = vmatprep.subr.mxu0 0.0
    %197 = vmatpush1.msra.mxu0 0.0
    %198 = vmatprep.subr.mxu0 0.0
    %199 = vmatpush1.msra.mxu0 0.0
    %200 = vmatprep.subr.mxu0 0.0
    %201 = vmatpush1.msra.mxu0 0.0
    %202 = vmatprep.subr.mxu0 %v159
    %203 = vmatpush1.msra.mxu0 %v158
    %204 = vmatprep.subr.mxu0 %v157
    %205 = vmatpush1.msra.mxu0 %v156
    %206 = vmatprep.subr.mxu0 %v155
    %207 = vmatpush1.msra.mxu0 %v154
    %208 = vmatprep.subr.mxu0 %v153
    %209 = vmatpush1.msra.mxu0 %v152
    %210 = vmatprep.subr.mxu0 0.0
    %211 = vmatpush2.msra.mxu0 0.0
    %212 = vmatprep.subr.mxu0 0.0
    %213 = vmatpush2.msra.mxu0 0.0
    %214 = vmatprep.subr.mxu0 0.0
    %215 = vmatpush2.msra.mxu0 0.0
    %216 = vmatprep.subr.mxu0 0.0
    %217 = vmatpush2.msra.mxu0 0.0
    %218 = vmatprep.subr.mxu0 0.0
    %219 = vmatpush2.msra.mxu0 0.0
    %220 = vmatprep.subr.mxu0 0.0
    %221 = vmatpush2.msra.mxu0 0.0
    %222 = vmatprep.subr.mxu0 0.0
    %223 = vmatpush2.msra.mxu0 0.0
    %224 = vmatprep.subr.mxu0 0.0
    %225 = vmatpush2.msra.mxu0 0.0
    %226 = vmatprep.subr.mxu0 0.0
    %227 = vmatpush2.msra.mxu0 0.0
    %228 = vmatprep.subr.mxu0 0.0
    %229 = vmatpush2.msra.mxu0 0.0
    %230 = vmatprep.subr.mxu0 0.0
    %231 = vmatpush2.msra.mxu0 0.0
    %232 = vmatprep.subr.mxu0 0.0
    %233 = vmatpush2.msra.mxu0 0.0
    %234 = vmatprep.subr.mxu0 0.0
    %235 = vmatpush2.msra.mxu0 0.0
    %236 = vmatprep.subr.mxu0 0.0
    %237 = vmatpush2.msra.mxu0 0.0
    %238 = vmatprep.subr.mxu0 0.0
    %239 = vmatpush2.msra.mxu0 0.0
    %240 = vmatprep.subr.mxu0 0.0
    %241 = vmatpush2.msra.mxu0 0.0
    %242 = vmatprep.mubr.f32.mxu0 0.0
    %243 = vmatmul.mubr.f32.gmra.mxu0 %v173
    %v244 = vpop.f32.mrf.mxu0
    %v245 = vadd.f32 %v165, %v244
    %v246 = vpop.f32.mrf.mxu0
    %v247 = vadd.f32 %v169, %v246
    %248 = vmatprep.mubr.f32.mxu0 0.0
    %249 = vmatmul.mubr.f32.gmra.mxu0 %v176
    %v250 = vpop.f32.mrf.mxu0
    %v251 = vadd.f32 %v165, %v250
    %v252 = vpop.f32.mrf.mxu0
    %v253 = vadd.f32 %v169, %v252
    %254 = vdwg.mxu0
    %v255 = vxor.u32 %v245, 2147483648
    %v256 = vxor.u32 %v247, 2147483648
    %v257 = vxor.u32 %v251, 2147483648
    %v258 = vxor.u32 %v253, 2147483648
    %v259 = vmul.f32 %v255, 1.442695
    %v260 = vpow.pop %v259
    %v261 = vmul.f32 %v256, 1.442695
    %v262 = vpow.pop %v261
    %v263 = vmul.f32 %v257, 1.442695
    %v264 = vpow.pop %v263
    %v265 = vmul.f32 %v258, 1.442695
    %v266 = vpow.pop %v265
    %v267 = vadd.f32 %v260, 1.0
    %v268 = vadd.f32 %v262, 1.0
    %v269 = vadd.f32 %v264, 1.0
    %v270 = vadd.f32 %v266, 1.0
    %v271 = vrcp.pop %v267
    %v272 = vmul.f32 1.0, %v271
    %v273 = vrcp.pop %v268
    %v274 = vmul.f32 1.0, %v273
    %v275 = vrcp.pop %v269
    %v276 = vmul.f32 1.0, %v275
    %v277 = vrcp.pop %v270
    %v278 = vmul.f32 1.0, %v277
    %v279 = vmul.f32 %v245, %v272
    %v280 = vmul.f32 %v247, %v274
    %v281 = vmul.f32 %v251, %v276
    %v282 = vmul.f32 %v253, %v278
    %vm283 = vcmp.lt.s32.totalorder %v120, 0
    %v284 = vsub.s32 0, %v120
    %v285 = vsel %vm283, %v284, %v120
    %v286 = vshrl.u32 %v285, 1
    %v287 = vand.u32 %v285, 1
    %v288 = vsub.s32 0, %v287
    %v289 = vsel %vm283, %v288, %v287
    %vm290 = vcmp.ne.s32.totalorder %v289, 0
    %vm291 = vcmp.lt.s32.totalorder %v289, 0
    %vm292 = vmand %vm291, %vm290
    %v293 = vadd.s32 %v289, 2
    %v294 = vsel %vm292, %v293, %v289
    %vm295 = vcmp.eq.s32.totalorder %v294, 0
    %296 = vrot.lane.b32.xlu0 %v279, 127
    %v297 = vpop.permute.xlu0 %296
    %298 = vrot.lane.b32.xlu0 %v281, 127
    %v299 = vpop.permute.xlu0 %298
    %v300 = vsub.f32 0.0, %v297
    %v301 = vsub.f32 0.0, %v299
    %302 = vrot.lane.b32.xlu0 %v279, 1
    %v303 = vpop.permute.xlu0 %302
    %304 = vrot.lane.b32.xlu0 %v281, 1
    %v305 = vpop.permute.xlu0 %304
    %v306 = vsel %vm295, %v300, %v303
    %v307 = vsel %vm295, %v301, %v305
    %v308 = vld [vmem:[%s4] sm:$0xff]
    %v309 = vld [vmem:[%s4 + $0x8] sm:$0xff]
    %v310 = vld [vmem:[%s4 + $0x10] sm:$0xff]
    %v311 = vld [vmem:[%s4 + $0x18] sm:$0xff]
    %v312 = vld [vmem:[%s4 + $0x20] sm:$0xff]
    %v313 = vld [vmem:[%s4 + $0x28] sm:$0xff]
    %v314 = vld [vmem:[%s4 + $0x30] sm:$0xff]
    %v315 = vld [vmem:[%s4 + $0x38] sm:$0xff]
    %v316 = vld [vmem:[%s4 + $0x40] sm:$0xff]
    %v317 = vld [vmem:[%s4 + $0x48] sm:$0xff]
    %v318 = vld [vmem:[%s4 + $0x50] sm:$0xff]
    %v319 = vld [vmem:[%s4 + $0x58] sm:$0xff]
    %v320 = vmul.f32 %v279, %v308
    %v321 = vmul.f32 %v281, %v309
    %v322 = vmul.f32 %v306, %v310
    %v323 = vmul.f32 %v307, %v311
    %v324 = vadd.f32 %v320, %v322
    %v325 = vadd.f32 %v321, %v323
    %v326 = vadd.f32 %v324, %v312
    %v327 = vadd.f32 %v325, %v313
    %v328 = vmul.f32 %v279, %v314
    %v329 = vmul.f32 %v281, %v315
    %v330 = vmul.f32 %v306, %v316
    %v331 = vmul.f32 %v307, %v317
    %v332 = vadd.f32 %v328, %v330
    %v333 = vadd.f32 %v329, %v331
    %v334 = vadd.f32 %v332, %v318
    %v335 = vadd.f32 %v333, %v319
    %v336 = vld [vmem:[#allocation7] sm:$0xff]
    %v337 = vld [vmem:[#allocation7 + $0x8] sm:$0xff]
    %338 = vmatprep.subr.mxu0 0.0
    %339 = vmatpush1.xpose.msra.mxu0 0.0
    %340 = vmatprep.subr.mxu0 0.0
    %341 = vmatpush1.xpose.msra.mxu0 0.0
    %342 = vmatprep.subr.mxu0 0.0
    %343 = vmatpush1.xpose.msra.mxu0 0.0
    %344 = vmatprep.subr.mxu0 0.0
    %345 = vmatpush1.xpose.msra.mxu0 0.0
    %346 = vmatprep.subr.mxu0 0.0
    %347 = vmatpush1.xpose.msra.mxu0 0.0
    %348 = vmatprep.subr.mxu0 0.0
    %349 = vmatpush1.xpose.msra.mxu0 0.0
    %350 = vmatprep.subr.mxu0 0.0
    %351 = vmatpush1.xpose.msra.mxu0 0.0
    %352 = vmatprep.subr.mxu0 0.0
    %353 = vmatpush1.xpose.msra.mxu0 0.0
    %354 = vmatprep.subr.mxu0 0.0
    %355 = vmatpush1.xpose.msra.mxu0 0.0
    %356 = vmatprep.subr.mxu0 0.0
    %357 = vmatpush1.xpose.msra.mxu0 0.0
    %358 = vmatprep.subr.mxu0 0.0
    %359 = vmatpush1.xpose.msra.mxu0 0.0
    %360 = vmatprep.subr.mxu0 0.0
    %361 = vmatpush1.xpose.msra.mxu0 0.0
    %362 = vmatprep.subr.mxu0 0.0
    %363 = vmatpush1.xpose.msra.mxu0 0.0
    %364 = vmatprep.subr.mxu0 0.0
    %365 = vmatpush1.xpose.msra.mxu0 0.0
    %366 = vmatprep.subr.mxu0 0.0
    %367 = vmatpush1.xpose.msra.mxu0 %v335
    %368 = vmatprep.subr.mxu0 0.0
    %369 = vmatpush1.xpose.msra.mxu0 %v334
    %370 = vmatprep.subr.mxu0 0.0
    %371 = vmatpush2.xpose.msra.mxu0 0.0
    %372 = vmatprep.subr.mxu0 0.0
    %373 = vmatpush2.xpose.msra.mxu0 0.0
    %374 = vmatprep.subr.mxu0 0.0
    %375 = vmatpush2.xpose.msra.mxu0 0.0
    %376 = vmatprep.subr.mxu0 0.0
    %377 = vmatpush2.xpose.msra.mxu0 0.0
    %378 = vmatprep.subr.mxu0 0.0
    %379 = vmatpush2.xpose.msra.mxu0 0.0
    %380 = vmatprep.subr.mxu0 0.0
    %381 = vmatpush2.xpose.msra.mxu0 0.0
    %382 = vmatprep.subr.mxu0 0.0
    %383 = vmatpush2.xpose.msra.mxu0 0.0
    %384 = vmatprep.subr.mxu0 0.0
    %385 = vmatpush2.xpose.msra.mxu0 0.0
    %386 = vmatprep.subr.mxu0 0.0
    %387 = vmatpush2.xpose.msra.mxu0 0.0
    %388 = vmatprep.subr.mxu0 0.0
    %389 = vmatpush2.xpose.msra.mxu0 0.0
    %390 = vmatprep.subr.mxu0 0.0
    %391 = vmatpush2.xpose.msra.mxu0 0.0
    %392 = vmatprep.subr.mxu0 0.0
    %393 = vmatpush2.xpose.msra.mxu0 0.0
    %394 = vmatprep.subr.mxu0 0.0
    %395 = vmatpush2.xpose.msra.mxu0 0.0
    %396 = vmatprep.subr.mxu0 0.0
    %397 = vmatpush2.xpose.msra.mxu0 0.0
    %398 = vmatprep.subr.mxu0 0.0
    %399 = vmatpush2.xpose.msra.mxu0 0.0
    %400 = vmatprep.subr.mxu0 0.0
    %401 = vmatpush2.xpose.msra.mxu0 0.0
    %402 = vmatprep.mubr.f32.mxu0 0.0
    %403 = vmatmul.mubr.f32.gmra.mxu0 %v326
    %v404 = vpop.f32.mrf.mxu0
    %v405 = vadd.f32 %v336, %v404
    %v406 = vpop.f32.mrf.mxu0
    %407 = vmatprep.mubr.f32.mxu0 0.0
    %408 = vmatmul.mubr.f32.gmra.mxu0 %v327
    %v409 = vpop.f32.mrf.mxu0
    %v410 = vadd.f32 %v337, %v409
    %v411 = vpop.f32.mrf.mxu0
    %412 = vdwg.mxu0
    %v413 = vmax.f32 %v405, 0.0
    %v414 = vmax.f32 %v410, 0.0
    %v415 = vmul.f32 %v413, %v413
    %v416 = vmul.f32 %v414, %v414
    %vm417 = vcmask 130048
    %v419 = vsel %vm417, %v415, 0
    %v422 = vsel %vm417, %v416, 0
    %424 = vmatprep.subr.mxu0 0.0
    %425 = vmatpush1.msra.mxu0 0.0
    %426 = vmatprep.subr.mxu0 0.0
    %427 = vmatpush1.msra.mxu0 0.0
    %428 = vmatprep.subr.mxu0 0.0
    %429 = vmatpush1.msra.mxu0 0.0
    %430 = vmatprep.subr.mxu0 0.0
    %431 = vmatpush1.msra.mxu0 0.0
    %432 = vmatprep.subr.mxu0 0.0
    %433 = vmatpush1.msra.mxu0 0.0
    %434 = vmatprep.subr.mxu0 0.0
    %435 = vmatpush1.msra.mxu0 0.0
    %436 = vmatprep.subr.mxu0 0.0
    %437 = vmatpush1.msra.mxu0 0.0
    %438 = vmatprep.subr.mxu0 0.0
    %439 = vmatpush1.msra.mxu0 0.0
    %440 = vmatprep.subr.mxu0 0.0
    %441 = vmatpush1.msra.mxu0 0.0
    %442 = vmatprep.subr.mxu0 0.0
    %443 = vmatpush1.msra.mxu0 0.0
    %444 = vmatprep.subr.mxu0 0.0
    %445 = vmatpush1.msra.mxu0 0.0
    %446 = vmatprep.subr.mxu0 0.0
    %447 = vmatpush1.msra.mxu0 0.0
    %448 = vmatprep.subr.mxu0 0.0
    %449 = vmatpush1.msra.mxu0 0.0
    %450 = vmatprep.subr.mxu0 0.0
    %451 = vmatpush1.msra.mxu0 0.0
    %452 = vmatprep.subr.mxu0 0.0
    %453 = vmatpush1.msra.mxu0 %v282
    %454 = vmatprep.subr.mxu0 0.0
    %455 = vmatpush1.msra.mxu0 %v280
    %456 = vmatprep.subr.mxu0 0.0
    %457 = vmatpush2.msra.mxu0 0.0
    %458 = vmatprep.subr.mxu0 0.0
    %459 = vmatpush2.msra.mxu0 0.0
    %460 = vmatprep.subr.mxu0 0.0
    %461 = vmatpush2.msra.mxu0 0.0
    %462 = vmatprep.subr.mxu0 0.0
    %463 = vmatpush2.msra.mxu0 0.0
    %464 = vmatprep.subr.mxu0 0.0
    %465 = vmatpush2.msra.mxu0 0.0
    %466 = vmatprep.subr.mxu0 0.0
    %467 = vmatpush2.msra.mxu0 0.0
    %468 = vmatprep.subr.mxu0 0.0
    %469 = vmatpush2.msra.mxu0 0.0
    %470 = vmatprep.subr.mxu0 0.0
    %471 = vmatpush2.msra.mxu0 0.0
    %472 = vmatprep.subr.mxu0 0.0
    %473 = vmatpush2.msra.mxu0 0.0
    %474 = vmatprep.subr.mxu0 0.0
    %475 = vmatpush2.msra.mxu0 0.0
    %476 = vmatprep.subr.mxu0 0.0
    %477 = vmatpush2.msra.mxu0 0.0
    %478 = vmatprep.subr.mxu0 0.0
    %479 = vmatpush2.msra.mxu0 0.0
    %480 = vmatprep.subr.mxu0 0.0
    %481 = vmatpush2.msra.mxu0 0.0
    %482 = vmatprep.subr.mxu0 0.0
    %483 = vmatpush2.msra.mxu0 0.0
    %484 = vmatprep.subr.mxu0 0.0
    %485 = vmatpush2.msra.mxu0 0.0
    %486 = vmatprep.subr.mxu0 0.0
    %487 = vmatpush2.msra.mxu0 0.0
    %488 = vmatprep.mubr.f32.mxu0 0.0
    %489 = vmatmul.mubr.f32.gmra.mxu0 %v419
    %v490 = vpop.f32.mrf.mxu0
    %v491 = vadd.f32 0.0, %v490
    %v492 = vpop.f32.mrf.mxu0
    %493 = vmatprep.mubr.f32.mxu0 0.0
    %494 = vmatmul.mubr.f32.gmra.mxu0 %v422
    %v495 = vpop.f32.mrf.mxu0
    %v496 = vadd.f32 0.0, %v495
    %v497 = vpop.f32.mrf.mxu0
    %498 = vdwg.mxu0
    %501 = vrot.lane.b32.xlu0 %v280, 64
    %v502 = vpop.permute.xlu0 %501
    %503 = vrot.lane.b32.xlu0 %v282, 64
    %v504 = vpop.permute.xlu0 %503
    %v507 = vmul.f32 %v491, %v502
    %v508 = vmul.f32 %v496, %v504
    %v509 = vld [vmem:[%s6] sm:$0xff]
    %v510 = vld [vmem:[%s6 + $0x8] sm:$0xff]
    %v511 = vld [vmem:[%s6 + $0x10] sm:$0xff]
    %v512 = vld [vmem:[%s6 + $0x18] sm:$0xff]
    %v513 = vld [vmem:[%s6 + $0x20] sm:$0xff]
    %v514 = vld [vmem:[%s6 + $0x28] sm:$0xff]
    %v515 = vld [vmem:[%s6 + $0x30] sm:$0xff]
    %v516 = vld [vmem:[%s6 + $0x38] sm:$0xff]
    %v517 = vlaneseq
    %v518 = vshrl.u32 %v517, 7
    %v519 = vsub.s32 2, %v518
    %v520 = vrot.slane %v70, %v519
    %vm521 = vcmask 523264
    %v523 = vsel %vm521, %v507, 0
    %v526 = vsel %vm521, %v508, 0
    %528 = vmatprep.subr.mxu0 0.0
    %529 = vmatpush1.msra.mxu0 0.0
    %530 = vmatprep.subr.mxu0 0.0
    %531 = vmatpush1.msra.mxu0 0.0
    %532 = vmatprep.subr.mxu0 0.0
    %533 = vmatpush1.msra.mxu0 0.0
    %534 = vmatprep.subr.mxu0 0.0
    %535 = vmatpush1.msra.mxu0 0.0
    %536 = vmatprep.subr.mxu0 0.0
    %537 = vmatpush1.msra.mxu0 0.0
    %538 = vmatprep.subr.mxu0 0.0
    %539 = vmatpush1.msra.mxu0 0.0
    %540 = vmatprep.subr.mxu0 0.0
    %541 = vmatpush1.msra.mxu0 0.0
    %542 = vmatprep.subr.mxu0 0.0
    %543 = vmatpush1.msra.mxu0 0.0
    %544 = vmatprep.subr.mxu0 0.0
    %545 = vmatpush1.msra.mxu0 %v516
    %546 = vmatprep.subr.mxu0 0.0
    %547 = vmatpush1.msra.mxu0 %v515
    %548 = vmatprep.subr.mxu0 0.0
    %549 = vmatpush1.msra.mxu0 %v514
    %550 = vmatprep.subr.mxu0 0.0
    %551 = vmatpush1.msra.mxu0 %v513
    %552 = vmatprep.subr.mxu0 0.0
    %553 = vmatpush1.msra.mxu0 %v512
    %554 = vmatprep.subr.mxu0 0.0
    %555 = vmatpush1.msra.mxu0 %v511
    %556 = vmatprep.subr.mxu0 0.0
    %557 = vmatpush1.msra.mxu0 %v510
    %558 = vmatprep.subr.mxu0 0.0
    %559 = vmatpush1.msra.mxu0 %v509
    %560 = vmatprep.subr.mxu0 0.0
    %561 = vmatpush2.msra.mxu0 0.0
    %562 = vmatprep.subr.mxu0 0.0
    %563 = vmatpush2.msra.mxu0 0.0
    %564 = vmatprep.subr.mxu0 0.0
    %565 = vmatpush2.msra.mxu0 0.0
    %566 = vmatprep.subr.mxu0 0.0
    %567 = vmatpush2.msra.mxu0 0.0
    %568 = vmatprep.subr.mxu0 0.0
    %569 = vmatpush2.msra.mxu0 0.0
    %570 = vmatprep.subr.mxu0 0.0
    %571 = vmatpush2.msra.mxu0 0.0
    %572 = vmatprep.subr.mxu0 0.0
    %573 = vmatpush2.msra.mxu0 0.0
    %574 = vmatprep.subr.mxu0 0.0
    %575 = vmatpush2.msra.mxu0 0.0
    %576 = vmatprep.subr.mxu0 0.0
    %577 = vmatpush2.msra.mxu0 0.0
    %578 = vmatprep.subr.mxu0 0.0
    %579 = vmatpush2.msra.mxu0 0.0
    %580 = vmatprep.subr.mxu0 0.0
    %581 = vmatpush2.msra.mxu0 0.0
    %582 = vmatprep.subr.mxu0 0.0
    %583 = vmatpush2.msra.mxu0 0.0
    %584 = vmatprep.subr.mxu0 0.0
    %585 = vmatpush2.msra.mxu0 0.0
    %586 = vmatprep.subr.mxu0 0.0
    %587 = vmatpush2.msra.mxu0 0.0
    %588 = vmatprep.subr.mxu0 0.0
    %589 = vmatpush2.msra.mxu0 0.0
    %590 = vmatprep.subr.mxu0 0.0
    %591 = vmatpush2.msra.mxu0 0.0
    %592 = vmatprep.mubr.f32.mxu0 0.0
    %593 = vmatmul.mubr.f32.gmra.mxu0 %v523
    %v594 = vpop.f32.mrf.mxu0
    %v595 = vadd.f32 %v520, %v594
    %v596 = vpop.f32.mrf.mxu0
    %597 = vmatprep.mubr.f32.mxu0 0.0
    %598 = vmatmul.mubr.f32.gmra.mxu0 %v526
    %v599 = vpop.f32.mrf.mxu0
    %v600 = vadd.f32 %v520, %v599
    %v601 = vpop.f32.mrf.mxu0
    %602 = vdwg.mxu0
    %v603 = vadd.f32 %v595, %v68
    %v604 = vadd.f32 %v600, %v69
    %605 = vst.msk [vmem:[#allocation8] sm:$0xff] %vm71, %v603
    %606 = vst.msk [vmem:[#allocation8 + $0x8] sm:$0xff] %vm71, %v604
    // Predicated region
    $region42: #{tpu_custom_call.1} parent=1 // pred_check
      _
    $region43: #{tpu_custom_call.1} parent=1 // pred_check_branch
      %608 = sbr.rel (0) target = $region45
    $region44: #{tpu_custom_call.1} parent=1 // pred_region
      %s610 = ssub.s32 256, 256
      %611 = vsyncadd [#allocation4], %s610
      %s612 = sshll.u32 [#allocation8], 4
      %s613 = int_to_ptr.vmem [resolvable:$true] %s612
      %618 = dma.vmem_to_hbm [thread:$0]  %s613, 256, %s7, [#allocation4], 128, 128, 8
    $region45: #{tpu_custom_call.1} parent=1 // pred_fallthru
      _
    // Predicated region
    $region46: #{tpu_custom_call.1} parent=1 // pred_check
      _
    $region47: #{tpu_custom_call.1} parent=1 // pred_check_branch
      %620 = sbr.rel (0) target = $region49
    $region48: #{tpu_custom_call.1} parent=1 // pred_region
      %621 = dma.done [#allocation4], 256
    $region49: #{tpu_custom_call.1} parent=1 // pred_fallthru
      _
    %622 = vsyncpa [#allocation3], 1
    %623 = vsyncpa [#allocation6], 1
    %624 = vsyncpa [#allocation4], 1

</llo_original>
